<compile_context>
chip_gen: v6e
topology: v6e:2x2x1
jax: 0.10.0
libtpu: 0.0.40
codegen_flags: <defaults>
</compile_context>

<pallas_src>
import functools

import jax
import jax.numpy as jnp
from jax.experimental import pallas as pl
from jax.experimental.pallas import tpu as pltpu


# --------------------------- helpers -----------------------------------------

def _round_up(x, m):
    return ((x + m - 1) // m) * m


def _pick_row_tile(M, target, align=8):
    """Row tile: big enough to pipeline, small enough for VMEM, and capped so the
    row grid has >=2 tiles whenever possible (megacore sharding on v7x)."""
    tm = min(_round_up(M, align), target)
    if M > align:
        tm = min(tm, _round_up(-(-M // 2), align))   # ceil(M/2) rounded to align
    return max(tm, align)


def _cparams(n_grid):
    return pltpu.CompilerParams(
        dimension_semantics=("parallel",) * n_grid,
        vmem_limit_bytes=64 * 1024 * 1024)


# --------------------------- Pallas kernels ----------------------------------

def _add_linear_kernel(x_ref, p_ref, w_ref, b_ref, o_ref):
    # fused with_pos_embed add + projection; weight already bf16-resident.
    x = (x_ref[...] + p_ref[...]).astype(jnp.bfloat16)
    acc = jnp.dot(x, w_ref[...], preferred_element_type=jnp.float32)
    o_ref[...] = (acc + b_ref[...]).astype(o_ref.dtype)


def add_linear(x, pos, w_bf16, b, *, out_dtype=None, row_tile=1024):
    """y = (x + pos) @ w + b ; row-tiled, bf16 weight resident, optional bf16 output."""
    M, K = x.shape
    N = w_bf16.shape[1]
    out_dtype = out_dtype or x.dtype
    # bf16 output blocks: keep row tiles 16-aligned so packed-sublane layout never
    # sees a half-tile window.
    tm = _pick_row_tile(M, row_tile, align=16)
    grid = (pl.cdiv(M, tm),)
    return pl.pallas_call(
        _add_linear_kernel,
        out_shape=jax.ShapeDtypeStruct((M, N), out_dtype),
        grid=grid,
        in_specs=[
            pl.BlockSpec((tm, K), lambda i: (i, 0)),
            pl.BlockSpec((tm, K), lambda i: (i, 0)),
            pl.BlockSpec((K, N), lambda i: (0, 0)),     # resident bf16 weight
            pl.BlockSpec((1, N), lambda i: (0, 0)),     # resident f32 bias
        ],
        out_specs=pl.BlockSpec((tm, N), lambda i: (i, 0)),
        compiler_params=_cparams(1),
    )(x, pos, w_bf16, b.reshape(1, N))


def _qproj_kernel(x_ref, p_ref, w_ref, b_ref, off_ref, attn_ref, *, n_off, n_heads, lp):
    # One matmul for [sampling offsets | attention logits] on (src + pos_embed);
    # per-head softmax epilogue written straight into the output ref (no concat temp);
    # divide replaced by EUP approx reciprocal.
    x = (x_ref[...] + p_ref[...]).astype(jnp.bfloat16)
    y = jnp.dot(x, w_ref[...], preferred_element_type=jnp.float32) + b_ref[...]
    off_ref[...] = y[:, :n_off].astype(off_ref.dtype)
    for h in range(n_heads):                     # static unrolled loop over heads
        c = y[:, n_off + h * lp: n_off + (h + 1) * lp]
        m = jnp.max(c, axis=-1, keepdims=True)
        e = jnp.exp(c - m)
        r = pl.reciprocal(jnp.sum(e, axis=-1, keepdims=True), approx=True)
        attn_ref[:, h * lp:(h + 1) * lp] = (e * r).astype(attn_ref.dtype)


def qproj_fused(q2d, pos2d, w_cat_bf16, b_cat, n_heads, n_levels, n_points,
                *, row_tile=1024):
    """Fused (src+pos) offset + attention-weight projection with per-head softmax."""
    M, K = q2d.shape
    n_tot = w_cat_bf16.shape[1]
    n_attn = n_heads * n_levels * n_points
    n_off = n_tot - n_attn
    lp = n_levels * n_points
    tm = _pick_row_tile(M, row_tile)
    grid = (pl.cdiv(M, tm),)
    kern = functools.partial(_qproj_kernel, n_off=n_off, n_heads=n_heads, lp=lp)
    # TODO(synk): n_off / n_attn are < 128 for typical configs -> masked vst stores;
    # pad to lane-dense widths if this projection ever dominates.
    offs, attn = pl.pallas_call(
        kern,
        out_shape=(jax.ShapeDtypeStruct((M, n_off), q2d.dtype),
                   jax.ShapeDtypeStruct((M, n_attn), q2d.dtype)),
        grid=grid,
        in_specs=[
            pl.BlockSpec((tm, K), lambda i: (i, 0)),
            pl.BlockSpec((tm, K), lambda i: (i, 0)),
            pl.BlockSpec((K, n_tot), lambda i: (0, 0)),   # resident bf16 weight
            pl.BlockSpec((1, n_tot), lambda i: (0, 0)),   # resident f32 bias
        ],
        out_specs=(pl.BlockSpec((tm, n_off), lambda i: (i, 0)),
                   pl.BlockSpec((tm, n_attn), lambda i: (i, 0))),
        compiler_params=_cparams(1),
    )(q2d, pos2d, w_cat_bf16, b_cat.reshape(1, n_tot))
    return offs, attn


def _proj_add_ln_kernel(x_ref, w_ref, b_ref, r_ref, g_ref, bt_ref, o_ref):
    # output projection + residual add + LayerNorm (eps=1e-5, biased var) fused.
    y = jnp.dot(x_ref[...].astype(jnp.bfloat16), w_ref[...],
                preferred_element_type=jnp.float32)
    y = y + b_ref[...] + r_ref[...].astype(jnp.float32)
    mu = jnp.mean(y, axis=-1, keepdims=True)
    var = jnp.mean(jnp.square(y - mu), axis=-1, keepdims=True)
    o_ref[...] = ((y - mu) * jax.lax.rsqrt(var + 1e-5)
                  * g_ref[...] + bt_ref[...]).astype(o_ref.dtype)


def proj_add_layernorm(x, w_bf16, b, resid, gamma, beta, *, row_tile=1024):
    M, K = x.shape
    N = w_bf16.shape[1]
    tm = _pick_row_tile(M, row_tile)
    grid = (pl.cdiv(M, tm),)
    return pl.pallas_call(
        _proj_add_ln_kernel,
        out_shape=jax.ShapeDtypeStruct((M, N), resid.dtype),
        grid=grid,
        in_specs=[
            pl.BlockSpec((tm, K), lambda i: (i, 0)),
            pl.BlockSpec((K, N), lambda i: (0, 0)),     # resident bf16 weight
            pl.BlockSpec((1, N), lambda i: (0, 0)),
            pl.BlockSpec((tm, N), lambda i: (i, 0)),
            pl.BlockSpec((1, N), lambda i: (0, 0)),
            pl.BlockSpec((1, N), lambda i: (0, 0)),
        ],
        out_specs=pl.BlockSpec((tm, N), lambda i: (i, 0)),
        compiler_params=_cparams(1),
    )(x, w_bf16, b.reshape(1, N), resid, gamma.reshape(1, N), beta.reshape(1, N))


def _ffn_add_ln_kernel(x_ref, w1_ref, b1_ref, w2_ref, b2_ref, g_ref, bt_ref, o_ref):
    x32 = x_ref[...].astype(jnp.float32)
    h = jnp.dot(x_ref[...].astype(jnp.bfloat16), w1_ref[...],
                preferred_element_type=jnp.float32) + b1_ref[...]
    h = jnp.maximum(h, 0.0).astype(jnp.bfloat16)       # ReLU; bf16 operand for 2nd dot
    y = jnp.dot(h, w2_ref[...], preferred_element_type=jnp.float32) + b2_ref[...]
    y = y + x32                                        # residual
    mu = jnp.mean(y, axis=-1, keepdims=True)
    var = jnp.mean(jnp.square(y - mu), axis=-1, keepdims=True)
    o_ref[...] = ((y - mu) * jax.lax.rsqrt(var + 1e-5)
                  * g_ref[...] + bt_ref[...]).astype(o_ref.dtype)


def ffn_add_layernorm(x, w1_bf16, b1, w2_bf16, b2, gamma, beta, *, row_tile=512):
    # With bf16-precast resident weights a 512-row tile (tm,Dff) f32 intermediate is
    # comfortably under the 32 MiB scoped VMEM budget even on v7x.
    M, C = x.shape
    Dff = w1_bf16.shape[1]
    tm = _pick_row_tile(M, row_tile)
    grid = (pl.cdiv(M, tm),)
    return pl.pallas_call(
        _ffn_add_ln_kernel,
        out_shape=jax.ShapeDtypeStruct((M, C), x.dtype),
        grid=grid,
        in_specs=[
            pl.BlockSpec((tm, C), lambda i: (i, 0)),
            pl.BlockSpec((C, Dff), lambda i: (0, 0)),   # resident bf16 weights
            pl.BlockSpec((1, Dff), lambda i: (0, 0)),
            pl.BlockSpec((Dff, C), lambda i: (0, 0)),
            pl.BlockSpec((1, C), lambda i: (0, 0)),
            pl.BlockSpec((1, C), lambda i: (0, 0)),
            pl.BlockSpec((1, C), lambda i: (0, 0)),
        ],
        out_specs=pl.BlockSpec((tm, C), lambda i: (i, 0)),
        compiler_params=_cparams(1),
    )(x, w1_bf16, b1.reshape(1, Dff), w2_bf16, b2.reshape(1, C),
      gamma.reshape(1, C), beta.reshape(1, C))


# --------------------------- JAX glue (sampling) ------------------------------

def _bilinear_sample_level(value_l, loc_l, Hl, Wl):
    """grid_sample(mode=bilinear, padding=zeros, align_corners=False).

    value_l: (N, Hl*Wl, Hh, Dh)   loc_l: (N, Lq, Hh, P, 2) normalized [0,1] (x,y)
    returns: (N, Lq, Hh, P, Dh)  (f32)
    """
    N, S, Hh, Dh = value_l.shape
    Lq, P = loc_l.shape[1], loc_l.shape[3]
    v = jnp.transpose(value_l, (0, 2, 1, 3))        # (N, Hh, S, Dh)
    loc = jnp.transpose(loc_l, (0, 2, 1, 3, 4))     # (N, Hh, Lq, P, 2)

    x = loc[..., 0] * Wl - 0.5
    y = loc[..., 1] * Hl - 0.5
    x0 = jnp.floor(x)
    y0 = jnp.floor(y)
    dx = x - x0
    dy = y - y0

    # TODO(synk): data-dependent bilinear gather stays in plain JAX; a fused Pallas
    # gather+blend kernel would need manual DMA (memory_space=pl.ANY + make_async_copy
    # with scalar-prefetched level offsets) and is the remaining large win.
    def tap(xi, yi, wgt):
        valid = ((xi >= 0) & (xi <= Wl - 1) & (yi >= 0) & (yi <= Hl - 1)).astype(jnp.float32)
        xi_c = jnp.clip(xi, 0, Wl - 1).astype(jnp.int32)
        yi_c = jnp.clip(yi, 0, Hl - 1).astype(jnp.int32)
        idx = (yi_c * Wl + xi_c).reshape(N, Hh, Lq * P)          # (N,Hh,Lq*P)
        g = jnp.take_along_axis(v, idx[..., None], axis=2)       # (N,Hh,Lq*P,Dh)
        g = g.reshape(N, Hh, Lq, P, Dh).astype(jnp.float32)
        return g * (wgt * valid)[..., None]

    out = (tap(x0, y0, (1.0 - dx) * (1.0 - dy))
           + tap(x0 + 1.0, y0, dx * (1.0 - dy))
           + tap(x0, y0 + 1.0, (1.0 - dx) * dy)
           + tap(x0 + 1.0, y0 + 1.0, dx * dy))
    return jnp.transpose(out, (0, 2, 1, 3, 4))       # (N, Lq, Hh, P, Dh)


def ms_deform_attn_core(params, src, pos_embed, memorys, pos_memory, reference_points,
                        spatial_shapes_py, level_start_index_py, n_heads, n_points):
    """Returns the pre-output-projection attention result, shape (N*Lq, C), f32."""
    N, Lq, C = src.shape
    _, Lin, _ = memorys.shape
    L = len(spatial_shapes_py)
    P = n_points
    Hh = n_heads
    Dh = C // Hh

    # value projection with fused (memorys + pos_memory); bf16 output halves the HBM
    # traffic of the downstream gather (largest tensor in the layer).
    value = add_linear(memorys.reshape(N * Lin, C), pos_memory.reshape(N * Lin, C),
                       params["value_w_bf16"], params["value_b"],
                       out_dtype=jnp.bfloat16).reshape(N, Lin, Hh, Dh)

    # fused (src + pos_embed) offset + attention-weight projection w/ per-head softmax
    offs, attn = qproj_fused(src.reshape(N * Lq, C), pos_embed.reshape(N * Lq, C),
                             params["qproj_w_bf16"], params["qproj_b"], Hh, L, P)
    offs = offs.reshape(N, Lq, Hh, L, P, 2)
    attn = attn.reshape(N, Lq, Hh, L, P)     # columns ordered (head, level, point)

    # sampling locations: ref + offset / (W, H)
    wh = jnp.asarray([[float(W), float(H)] for (H, W) in spatial_shapes_py],
                     dtype=jnp.float32)                                  # (L, 2)
    sampling_locations = (reference_points[:, :, None, :, None, :]
                          + offs / wh[None, None, None, :, None, :])     # (N,Lq,Hh,L,P,2)

    # per-level gather + immediate attention-weighted accumulation (Dh on lanes);
    # no (N,Lq,Hh,L,P,Dh) stack / transpose / broadcast_to is ever materialized.
    acc = jnp.zeros((N, Lq, Hh, Dh), jnp.float32)
    for lid, (Hl, Wl) in enumerate(spatial_shapes_py):
        start = level_start_index_py[lid]
        value_l = value[:, start:start + Hl * Wl]            # (N, Hl*Wl, Hh, Dh) bf16
        loc_l = sampling_locations[:, :, :, lid]             # (N, Lq, Hh, P, 2)
        taps = _bilinear_sample_level(value_l, loc_l, Hl, Wl)  # (N, Lq, Hh, P, Dh) f32
        acc = acc + jnp.einsum('nqhpd,nqhp->nqhd', taps, attn[:, :, :, lid])

    return acc.reshape(N * Lq, C)


def decoder_layer_forward(params, src, pos_embed, memorys, pos_memory,
                          reference_points, spatial_shapes_py, level_start_index_py,
                          spatial_shape_grids, level_start_index_grid,
                          n_heads, n_points):
    N, Lq, C = src.shape
    # with_pos_embed adds are fused into the Pallas projection kernels.
    attn_out = ms_deform_attn_core(params, src, pos_embed, memorys, pos_memory,
                                   reference_points, spatial_shapes_py,
                                   level_start_index_py, n_heads, n_points)
    # MSDeformAttn output projection + residual + LayerNorm1 fused (dropout1 == identity)
    src_n = proj_add_layernorm(attn_out, params["out_w_bf16"], params["out_b"],
                               src.reshape(N * Lq, C),
                               params["norm1_g"], params["norm1_b"])
    # default FFN (ffn_type='default') ignores spatial_shape_grids / level_start_index_grid;
    # Linear1 -> ReLU -> Linear2 + residual + LayerNorm2 fused in one kernel.
    out = ffn_add_layernorm(src_n, params["w1_bf16"], params["b1"],
                            params["w2_bf16"], params["b2"],
                            params["norm2_g"], params["norm2_b"])
    return out.reshape(N, Lq, C)


# --------------------------- pure-JAX reference -------------------------------

def _reference_forward(params, src, pos_embed, memorys, pos_memory,
                       reference_points, spatial_shapes_py, level_start_index_py,
                       n_heads, n_points):
    N, Lq, C = src.shape
    Hh, P = n_heads, n_points
    L = len(spatial_shapes_py)
    Dh = C // Hh
    q = src + pos_embed
    mem = memorys + pos_memory
    Lin = mem.shape[1]
    value = (mem.reshape(N * Lin, C) @ params["value_w"]
             + params["value_b"]).reshape(N, Lin, Hh, Dh)
    q2d = q.reshape(N * Lq, C)
    offs = (q2d @ params["off_w"] + params["off_b"]).reshape(N, Lq, Hh, L, P, 2)
    logits = (q2d @ params["attn_w"] + params["attn_b"]).reshape(N, Lq, Hh, L * P)
    attn = jax.nn.softmax(logits, axis=-1).reshape(N, Lq, Hh, L, P)
    wh = jnp.asarray([[float(W), float(H)] for (H, W) in spatial_shapes_py], jnp.float32)
    loc = reference_points[:, :, None, :, None, :] + offs / wh[None, None, None, :, None, :]
    acc = jnp.zeros((N, Lq, Hh, Dh), jnp.float32)
    for lid, (Hl, Wl) in enumerate(spatial_shapes_py):
        start = level_start_index_py[lid]
        taps = _bilinear_sample_level(value[:, start:start + Hl * Wl],
                                      loc[:, :, :, lid], Hl, Wl)
        acc = acc + jnp.einsum('nqhpd,nqhp->nqhd', taps, attn[:, :, :, lid])
    src2 = acc.reshape(N * Lq, C) @ params["out_w"] + params["out_b"]

    def ln(x, g, b):
        mu = jnp.mean(x, -1, keepdims=True)
        var = jnp.mean((x - mu) ** 2, -1, keepdims=True)
        return (x - mu) * jax.lax.rsqrt(var + 1e-5) * g + b

    s = ln(src.reshape(N * Lq, C) + src2, params["norm1_g"], params["norm1_b"])
    h = jnp.maximum(s @ params["w1"] + params["b1"], 0.0)
    out = ln(s + h @ params["w2"] + params["b2"], params["norm2_g"], params["norm2_b"])
    return out.reshape(N, Lq, C)


# --------------------------- parameters & main --------------------------------

def init_params(key, d_model, d_ffn, n_heads, n_levels, n_points):
    ks = jax.random.split(key, 8)
    scale = 0.05

    def w(k, shape):
        return (scale * jax.random.normal(k, shape)).astype(jnp.float32)

    return {
        "value_w": w(ks[0], (d_model, d_model)),
        "value_b": jnp.zeros((d_model,), jnp.float32),
        "off_w":   w(ks[1], (d_model, n_heads * n_levels * n_points * 2)),
        "off_b":   w(ks[2], (n_heads * n_levels * n_points * 2,)),
        "attn_w":  w(ks[3], (d_model, n_heads * n_levels * n_points)),
        "attn_b":  jnp.zeros((n_heads * n_levels * n_points,), jnp.float32),
        "out_w":   w(ks[4], (d_model, d_model)),
        "out_b":   jnp.zeros((d_model,), jnp.float32),
        "norm1_g": jnp.ones((d_model,), jnp.float32),
        "norm1_b": jnp.zeros((d_model,), jnp.float32),
        "w1":      w(ks[5], (d_model, d_ffn)),
        "b1":      jnp.zeros((d_ffn,), jnp.float32),
        "w2":      w(ks[6], (d_ffn, d_model)),
        "b2":      jnp.zeros((d_model,), jnp.float32),
        "norm2_g": jnp.ones((d_model,), jnp.float32),
        "norm2_b": jnp.zeros((d_model,), jnp.float32),
    }


def prepare_params(params):
    """One-time: pre-cast matmul weights to bf16 and cache the concatenated
    [sampling-offset | attention-logit] projection weight/bias."""
    prepared = dict(params)
    prepared["value_w_bf16"] = params["value_w"].astype(jnp.bfloat16)
    prepared["qproj_w_bf16"] = jnp.concatenate(
        [params["off_w"], params["attn_w"]], axis=1).astype(jnp.bfloat16)
    prepared["qproj_b"] = jnp.concatenate([params["off_b"], params["attn_b"]], axis=0)
    prepared["out_w_bf16"] = params["out_w"].astype(jnp.bfloat16)
    prepared["w1_bf16"] = params["w1"].astype(jnp.bfloat16)
    prepared["w2_bf16"] = params["w2"].astype(jnp.bfloat16)
    return prepared


if __name__ == "__main__":
    # small config consistent with the module
    d_model, d_ffn = 64, 128
    n_heads, n_levels, n_points = 4, 2, 2
    N, Lq = 2, 8
    spatial_shapes_py = [(4, 4), (2, 2)]                 # per-level (H, W) of memory
    level_start_index_py = [0, 16]
    Lin = sum(h * w for h, w in spatial_shapes_py)       # 20

    key = jax.random.PRNGKey(0)
    k = jax.random.split(key, 8)
    params = prepare_params(init_params(k[0], d_model, d_ffn, n_heads, n_levels, n_points))

    src = jax.random.normal(k[1], (N, Lq, d_model), jnp.float32)
    pos_embed = jax.random.normal(k[2], (N, Lq, d_model), jnp.float32)
    memorys = jax.random.normal(k[3], (N, Lin, d_model), jnp.float32)
    pos_memory = jax.random.normal(k[4], (N, Lin, d_model), jnp.float32)
    reference_points = jax.random.uniform(k[5], (N, Lq, n_levels, 2), jnp.float32)

    # tensor forms kept for interface parity; static python lists drive level slicing
    spatial_shapes = jnp.asarray(spatial_shapes_py, jnp.int32)
    level_start_index = jnp.asarray(level_start_index_py, jnp.int32)
    spatial_shape_grids = jnp.asarray([(4, 2)], jnp.int32)       # unused by default FFN
    level_start_index_grid = jnp.asarray([0], jnp.int32)         # unused by default FFN

    out = decoder_layer_forward(params, src, pos_embed, memorys, pos_memory,
                                reference_points, spatial_shapes_py, level_start_index_py,
                                spatial_shape_grids, level_start_index_grid,
                                n_heads, n_points)
    out = jax.block_until_ready(out)
    assert out.shape == (N, Lq, d_model)
    assert bool(jnp.all(jnp.isfinite(out)))

    # numerical check vs pure-JAX f32 reference (loose tolerance: bf16 MXU operands
    # and bf16-stored value tensor)
    ref = _reference_forward(params, src, pos_embed, memorys, pos_memory,
                             reference_points, spatial_shapes_py, level_start_index_py,
                             n_heads, n_points)
    max_err = float(jnp.max(jnp.abs(out - ref)))
    assert bool(jnp.allclose(out, ref, atol=5e-2, rtol=5e-2)), max_err

    print("KERNEL_OK")
</pallas_src>

<mosaic_0001>
module attributes {stable_mosaic.version = 11 : i64} {
  func.func @_add_linear_kernel(%arg0: i32, %arg1: memref<32x64xf32, #tpu.memory_space<vmem>>, %arg2: memref<32x64xf32, #tpu.memory_space<vmem>>, %arg3: memref<64x64xbf16, #tpu.memory_space<vmem>>, %arg4: memref<1x64xf32, #tpu.memory_space<vmem>>, %arg5: memref<32x64xbf16, #tpu.memory_space<vmem>>) attributes {dimension_semantics = [#tpu.dimension_semantics<parallel>], iteration_bounds = array<i64: 2>, scalar_prefetch = 0 : i64, scratch_operands = 0 : i64, tpu.core_type = #tpu.core_type<tc>, window_params = [{transform_indices = @transform_0, window_bounds = array<i64: 32, 64>}, {transform_indices = @transform_1, window_bounds = array<i64: 32, 64>}, {pipeline_mode = #tpu.pipeline_mode<synchronous>, transform_indices = @transform_2, window_bounds = array<i64: 64, 64>}, {pipeline_mode = #tpu.pipeline_mode<synchronous>, transform_indices = @transform_3, window_bounds = array<i64: 1, 64>}, {transform_indices = @transform_4, window_bounds = array<i64: 32, 64>}]} {
    %c0 = arith.constant 0 : index
    %c0_0 = arith.constant 0 : index
    %0 = vector.load %arg1[%c0, %c0_0] : memref<32x64xf32, #tpu.memory_space<vmem>>, vector<32x64xf32>
    %c0_1 = arith.constant 0 : index
    %c0_2 = arith.constant 0 : index
    %1 = vector.load %arg2[%c0_1, %c0_2] : memref<32x64xf32, #tpu.memory_space<vmem>>, vector<32x64xf32>
    %2 = arith.addf %0, %1 : vector<32x64xf32>
    %3 = arith.truncf %2 : vector<32x64xf32> to vector<32x64xbf16>
    %c0_3 = arith.constant 0 : index
    %c0_4 = arith.constant 0 : index
    %4 = vector.load %arg3[%c0_3, %c0_4] : memref<64x64xbf16, #tpu.memory_space<vmem>>, vector<64x64xbf16>
    %cst = arith.constant dense<0.000000e+00> : vector<32x64xf32>
    %5 = tpu.matmul %3, %4, %cst {dimension_numbers = #tpu.dot_dimension_numbers<[1], [0], [0], [1], [0, 0, 1, 1], [], []>} : vector<32x64xbf16>, vector<64x64xbf16>, vector<32x64xf32> -> vector<32x64xf32>
    %c0_5 = arith.constant 0 : index
    %c0_6 = arith.constant 0 : index
    %6 = vector.load %arg4[%c0_5, %c0_6] : memref<1x64xf32, #tpu.memory_space<vmem>>, vector<1x64xf32>
    %7 = vector.broadcast %6 : vector<1x64xf32> to vector<32x64xf32>
    %8 = arith.addf %5, %7 : vector<32x64xf32>
    %9 = arith.truncf %8 : vector<32x64xf32> to vector<32x64xbf16>
    %c0_7 = arith.constant 0 : index
    %c0_8 = arith.constant 0 : index
    %10 = vector.load %arg5[%c0_7, %c0_8] : memref<32x64xbf16, #tpu.memory_space<vmem>>, vector<32x64xbf16>
    tpu.vector_store %arg5[%c0_7, %c0_8], %9 {strides = array<i32>} : memref<32x64xbf16, #tpu.memory_space<vmem>>, vector<32x64xbf16>,
    return
  }
  func.func @transform_0(%arg0: i32) -> (i32, i32) {
    %c0_i32 = arith.constant 0 : i32
    %c0_i32_0 = arith.constant 0 : i32
    return %arg0, %c0_i32 : i32, i32
  }
  func.func @transform_1(%arg0: i32) -> (i32, i32) {
    %c0_i32 = arith.constant 0 : i32
    %c0_i32_0 = arith.constant 0 : i32
    return %arg0, %c0_i32 : i32, i32
  }
  func.func @transform_2(%arg0: i32) -> (i32, i32) {
    %c0_i32 = arith.constant 0 : i32
    %c0_i32_0 = arith.constant 0 : i32
    %c0_i32_1 = arith.constant 0 : i32
    return %c0_i32, %c0_i32_0 : i32, i32
  }
  func.func @transform_3(%arg0: i32) -> (i32, i32) {
    %c0_i32 = arith.constant 0 : i32
    %c0_i32_0 = arith.constant 0 : i32
    %c0_i32_1 = arith.constant 0 : i32
    return %c0_i32, %c0_i32_0 : i32, i32
  }
  func.func @transform_4(%arg0: i32) -> (i32, i32) {
    %c0_i32 = arith.constant 0 : i32
    %c0_i32_0 = arith.constant 0 : i32
    return %arg0, %c0_i32 : i32, i32
  }
}

</mosaic_0001>

<llo_original>
// kernel: tpu_custom_call.1
$region0: #{tpu_custom_call.1}
  #allocation0 [shape = 'u32[]', space=smem, size = 0x4, offset = 0x4, fixed_abs, tag = 'smem constant byte address 0x4 - core index']
  #allocation1 [shape = 'u32[144,128]{1,0:T(1,128)}', space=vmem, size = 0x12000, scoped, tag = 'internal scratch']
  %s0 = inlined_call_operand.hbm [shape: f32[40,64], index: 0, kind: input, shape index: {}]
  %s1 = inlined_call_operand.hbm [shape: f32[40,64], index: 1, kind: input, shape index: {}]
  %s2 = inlined_call_operand.hbm [shape: bf16[64,64], index: 2, kind: input, shape index: {}]
  %s3 = inlined_call_operand.vmem [shape: f32[1,64], index: 3, kind: input, shape index: {}]
  %s4 = inlined_call_operand.hbm [shape: bf16[40,64], index: 4, kind: output, shape index: {}]
  %s5 = sld [smem:[#allocation0]]
  $region61: #{tpu_custom_call.1} parent=0
    _
  %s7 = ssub.s32 1, %s5
  %s8 = scalar_select 0, %s7, %s5
  $region1: #{tpu_custom_call.1} parent=0
    #allocation2 [shape = 'u8[32768]{0}', space=vmem, size = 0x8000, scoped, tag = 'input window, operand 0']
    #allocation3 [shape = 's32[2]{0}', space=sflag, size = 0x8, scoped, tag = 'scoped memory for tpu_custom_call.1']
    #allocation4 [shape = 's32[2]{0}', space=sflag, size = 0x8, scoped, tag = 'scoped memory for tpu_custom_call.1']
    #allocation5 [shape = 'u8[32768]{0}', space=vmem, size = 0x8000, scoped, tag = 'input window, operand 1']
    #allocation6 [shape = 's32[2]{0}', space=sflag, size = 0x8, scoped, tag = 'scoped memory for tpu_custom_call.1']
    #allocation7 [shape = 'u8[16384]{0}', space=vmem, size = 0x4000, scoped, tag = 'input window, operand 2, single buffered']
    #allocation8 [shape = 'u8[16384]{0}', space=vmem, size = 0x4000, scoped, tag = 'output window, operand 0']
    %9 = vsyncpa [#allocation3], 0
    %s10 = scalar_lea.sflag [#allocation3], 1
    %11 = vsyncpa %s10, 0
    %12 = vsyncpa [#allocation6], 0
    %s13 = scalar_lea.sflag [#allocation6], 1
    %14 = vsyncpa %s13, 0
    %15 = vsyncpa [#allocation4], 0
    %s16 = scalar_lea.sflag [#allocation4], 1
    %17 = vsyncpa %s16, 0
    loop: start=0, step=1, limit=4
    $region2: #{tpu_custom_call.1} parent=1 // loop_pre_header
      _
    $region3: #{tpu_custom_call.1} parent=1 // loop_header
      %s19 = sphi 0, %s23
      %p20 = scmp.ge.s32.totalorder %s19, 4
      %s29 = sphi 0, %s31
      %s32 = sphi 0, %s29
      %s33 = sphi 0, %s32
      %s49 = sphi 0, %s33
      %s55 = sphi 0, %s57
      %s58 = sphi 0, %s55
      %s59 = sphi 0, %s58
      %s75 = sphi 0, %s59
      %s79 = sphi 0, %s79
      %s81 = sphi 0, %s79
      %s82 = sphi 0, %s81
      %s96 = sphi 0, %s82
      %s100 = sphi 0, %s100
      %s102 = sphi 0, %s100
      %s103 = sphi 0, %s102
      %s117 = sphi 0, %s103
      %s123 = sphi 0, %s125
      %s126 = sphi 0, %s123
      %s127 = sphi 0, %s126
      %s143 = sphi 0, %s127
    $region4: #{tpu_custom_call.1} parent=1 // loop_header_branch
      %22 = sbr.rel (%p20) target = $region8
    $region5: #{tpu_custom_call.1} parent=1 // loop_body
      %s24 = ssub.s32 %s19, 1
      %s25 = ssub.s32 %s19, 2
      %s26 = sadd.s32 %s19, 1
      %s27 = ssub.s32 %s19, %s26
      %p28 = scmp.eq.s32.totalorder %s27, 0
      %s30 = sadd.s32 %s29, 1
      %s31 = scalar_select %p28, %s29, %s30
      %p34 = pneg %p28
      %p35 = scmp.eq.s32.totalorder %s19, 1
      %p36 = por %p34, %p35
      %p37 = scmp.ne.s32.totalorder %s29, %s32
      %p38 = scmp.eq.s32.totalorder %s19, 0
      %p39 = por %p37, %p38
      %p40 = scmp.ne.s32.totalorder %s29, %s32
      %p41 = scmp.eq.s32.totalorder %s24, 1
      %p42 = por %p40, %p41
      %p43 = scmp.ne.s32.totalorder %s32, %s33
      %p44 = scmp.eq.s32.totalorder %s24, 0
      %p45 = por %p43, %p44
      %p46 = scmp.ne.s32.totalorder %s32, %s33
      %p47 = scmp.eq.s32.totalorder %s25, 1
      %p48 = por %p46, %p47
      %p50 = scmp.ne.s32.totalorder %s33, %s49
      %p51 = scmp.eq.s32.totalorder %s25, 0
      %p52 = por %p50, %p51
      %s53 = ssub.s32 %s19, %s26
      %p54 = scmp.eq.s32.totalorder %s53, 0
      %s56 = sadd.s32 %s55, 1
      %s57 = scalar_select %p54, %s55, %s56
      %p60 = pneg %p54
      %p61 = scmp.eq.s32.totalorder %s19, 1
      %p62 = por %p60, %p61
      %p63 = scmp.ne.s32.totalorder %s55, %s58
      %p64 = scmp.eq.s32.totalorder %s19, 0
      %p65 = por %p63, %p64
      %p66 = scmp.ne.s32.totalorder %s55, %s58
      %p67 = scmp.eq.s32.totalorder %s24, 1
      %p68 = por %p66, %p67
      %p69 = scmp.ne.s32.totalorder %s58, %s59
      %p70 = scmp.eq.s32.totalorder %s24, 0
      %p71 = por %p69, %p70
      %p72 = scmp.ne.s32.totalorder %s58, %s59
      %p73 = scmp.eq.s32.totalorder %s25, 1
      %p74 = por %p72, %p73
      %p76 = scmp.ne.s32.totalorder %s59, %s75
      %p77 = scmp.eq.s32.totalorder %s25, 0
      %p78 = por %p76, %p77
      %s80 = sadd.s32 %s79, 1
      %p83 = scmp.eq.s32.totalorder %s19, 1
      %p84 = scmp.ne.s32.totalorder %s79, %s81
      %p85 = scmp.eq.s32.totalorder %s19, 0
      %p86 = por %p84, %p85
      %p87 = scmp.ne.s32.totalorder %s79, %s81
      %p88 = scmp.eq.s32.totalorder %s24, 1
      %p89 = por %p87, %p88
      %p90 = scmp.ne.s32.totalorder %s81, %s82
      %p91 = scmp.eq.s32.totalorder %s24, 0
      %p92 = por %p90, %p91
      %p93 = scmp.ne.s32.totalorder %s81, %s82
      %p94 = scmp.eq.s32.totalorder %s25, 1
      %p95 = por %p93, %p94
      %p97 = scmp.ne.s32.totalorder %s82, %s96
      %p98 = scmp.eq.s32.totalorder %s25, 0
      %p99 = por %p97, %p98
      %s101 = sadd.s32 %s100, 1
      %p104 = scmp.eq.s32.totalorder %s19, 1
      %p105 = scmp.ne.s32.totalorder %s100, %s102
      %p106 = scmp.eq.s32.totalorder %s19, 0
      %p107 = por %p105, %p106
      %p108 = scmp.ne.s32.totalorder %s100, %s102
      %p109 = scmp.eq.s32.totalorder %s24, 1
      %p110 = por %p108, %p109
      %p111 = scmp.ne.s32.totalorder %s102, %s103
      %p112 = scmp.eq.s32.totalorder %s24, 0
      %p113 = por %p111, %p112
      %p114 = scmp.ne.s32.totalorder %s102, %s103
      %p115 = scmp.eq.s32.totalorder %s25, 1
      %p116 = por %p114, %p115
      %p118 = scmp.ne.s32.totalorder %s103, %s117
      %p119 = scmp.eq.s32.totalorder %s25, 0
      %p120 = por %p118, %p119
      %s121 = ssub.s32 %s19, %s26
      %p122 = scmp.eq.s32.totalorder %s121, 0
      %s124 = sadd.s32 %s123, 1
      %s125 = scalar_select %p122, %s123, %s124
      %p128 = pneg %p122
      %p129 = scmp.eq.s32.totalorder %s19, 1
      %p130 = por %p128, %p129
      %p131 = scmp.ne.s32.totalorder %s123, %s126
      %p132 = scmp.eq.s32.totalorder %s19, 0
      %p133 = por %p131, %p132
      %p134 = scmp.ne.s32.totalorder %s123, %s126
      %p135 = scmp.eq.s32.totalorder %s24, 1
      %p136 = por %p134, %p135
      %p137 = scmp.ne.s32.totalorder %s126, %s127
      %p138 = scmp.eq.s32.totalorder %s24, 0
      %p139 = por %p137, %p138
      %p140 = scmp.ne.s32.totalorder %s126, %s127
      %p141 = scmp.eq.s32.totalorder %s25, 1
      %p142 = por %p140, %p141
      %p144 = scmp.ne.s32.totalorder %s127, %s143
      %p145 = scmp.eq.s32.totalorder %s25, 0
      %p146 = por %p144, %p145
      %p147 = scmp.le.s32.totalorder 1, %s19
      %p148 = scmp.lt.s32.totalorder %s19, 3
      %p149 = pnand %p147, %p148
      %p150 = pneg %p149
      // Predicated region
      $region9: #{tpu_custom_call.1} parent=5 // pred_check
        _
      $region10: #{tpu_custom_call.1} parent=5 // pred_check_branch
        %152 = sbr.rel (%p149) target = $region12
      $region11: #{tpu_custom_call.1} parent=5 // pred_region
        %s153 = ssub.s32 %s19, 1
        // Predicated region
        $region13: #{tpu_custom_call.1} parent=11 // pred_check
          %p154 = pneg %p92
        $region14: #{tpu_custom_call.1} parent=11 // pred_check_branch
          %156 = sbr.rel (%p154) target = $region16
        $region15: #{tpu_custom_call.1} parent=11 // pred_region
          %s158 = ssub.s32 512, 512
          %159 = vsyncadd [#allocation6], %s158
          %s160 = sshll.u32 [#allocation7], 4
          %s161 = int_to_ptr.vmem [resolvable:$true] %s160
          %166 = dma.hbm_to_vmem [thread:$0]  %s2, 512, %s161, [#allocation6], 64, 64, 4
        $region16: #{tpu_custom_call.1} parent=11 // pred_fallthru
          _
        // Predicated region
        $region17: #{tpu_custom_call.1} parent=11 // pred_check
          %p167 = pneg %p113
        $region18: #{tpu_custom_call.1} parent=11 // pred_check_branch
          %169 = sbr.rel (%p167) target = $region20
        $region19: #{tpu_custom_call.1} parent=11 // pred_region
          _
        $region20: #{tpu_custom_call.1} parent=11 // pred_fallthru
          _
      $region12: #{tpu_custom_call.1} parent=5 // pred_fallthru
        _
      %p170 = scmp.lt.s32.totalorder %s19, 2
      // Predicated region
      $region21: #{tpu_custom_call.1} parent=5 // pred_check
        %p171 = pneg %p170
      $region22: #{tpu_custom_call.1} parent=5 // pred_check_branch
        %173 = sbr.rel (%p171) target = $region24
      $region23: #{tpu_custom_call.1} parent=5 // pred_region
        // Predicated region
        $region25: #{tpu_custom_call.1} parent=23 // pred_check
          %p174 = pneg %p39
        $region26: #{tpu_custom_call.1} parent=23 // pred_check_branch
          %176 = sbr.rel (%p174) target = $region28
        $region27: #{tpu_custom_call.1} parent=23 // pred_region
          %s177 = sand.u32 %s29, 1
          %s178 = scalar_lea.sflag [#allocation3], %s177
          %s179 = sand.u32 %s29, 1
          %s180 = smul.addr %s179, 32
          %s181 = scalar_lea.vmem [#allocation2], %s180
          %s182 = smul.u32 4, %s19
          %s183 = ssub.s32 5, %s182
          %p184 = scmp.lt.s32.totalorder %s183, 4
          %s185 = scalar_select %p184, %s183, 4
          %s186 = smul.u32 128, %s185
          %s188 = ssub.s32 512, %s186
          %189 = vsyncadd %s178, %s188
          %p190 = scmp.ne.s32.totalorder 0, %s186
          %s191 = smul.addr %s182, 128
          %s192 = scalar_lea.hbm %s0, %s191
          %s193 = smul.u32 8, %s185
          %s194 = sshll.u32 %s181, 4
          %s195 = int_to_ptr.vmem [resolvable:$true] %s194
          %s196 = sshll.u32 %s193, 4
          %200 = dma.hbm_to_vmem [thread:$0]  (%p190), %s192, %s196, %s195, %s178, 128, 128, 8
        $region28: #{tpu_custom_call.1} parent=23 // pred_fallthru
          _
        // Predicated region
        $region29: #{tpu_custom_call.1} parent=23 // pred_check
          %p201 = pneg %p65
        $region30: #{tpu_custom_call.1} parent=23 // pred_check_branch
          %203 = sbr.rel (%p201) target = $region32
        $region31: #{tpu_custom_call.1} parent=23 // pred_region
          %s204 = sand.u32 %s19, 1
          %s205 = scalar_lea.sflag [#allocation6], %s204
          %s206 = sand.u32 %s55, 1
          %s207 = smul.addr %s206, 32
          %s208 = scalar_lea.vmem [#allocation5], %s207
          %s209 = smul.u32 4, %s19
          %s210 = ssub.s32 5, %s209
          %p211 = scmp.lt.s32.totalorder %s210, 4
          %s212 = scalar_select %p211, %s210, 4
          %s213 = smul.u32 128, %s212
          %s215 = ssub.s32 512, %s213
          %216 = vsyncadd %s205, %s215
          %p217 = scmp.ne.s32.totalorder 0, %s213
          %s218 = smul.addr %s209, 128
          %s219 = scalar_lea.hbm %s1, %s218
          %s220 = smul.u32 8, %s212
          %s221 = sshll.u32 %s208, 4
          %s222 = int_to_ptr.vmem [resolvable:$true] %s221
          %s223 = sshll.u32 %s220, 4
          %227 = dma.hbm_to_vmem [thread:$0]  (%p217), %s219, %s223, %s222, %s205, 128, 128, 8
        $region32: #{tpu_custom_call.1} parent=23 // pred_fallthru
          _
      $region24: #{tpu_custom_call.1} parent=5 // pred_fallthru
        _
      %p228 = scmp.le.s32.totalorder 1, %s19
      %p229 = scmp.lt.s32.totalorder %s19, 3
      %p230 = pnand %p228, %p229
      %p231 = pneg %p230
      // Predicated region
      $region33: #{tpu_custom_call.1} parent=5 // pred_check
        _
      $region34: #{tpu_custom_call.1} parent=5 // pred_check_branch
        %233 = sbr.rel (%p230) target = $region36
      $region35: #{tpu_custom_call.1} parent=5 // pred_region
        %s234 = ssub.s32 %s19, 1
        %s235 = sand.u32 %s32, 1
        %s236 = scalar_lea.sflag [#allocation3], %s235
        %s237 = sand.u32 %s32, 1
        %s238 = smul.addr %s237, 32
        %s239 = scalar_lea.vmem [#allocation2], %s238
        // Predicated region
        $region37: #{tpu_custom_call.1} parent=35 // pred_check
          %p240 = pneg %p45
        $region38: #{tpu_custom_call.1} parent=35 // pred_check_branch
          %242 = sbr.rel (%p240) target = $region40
        $region39: #{tpu_custom_call.1} parent=35 // pred_region
          %243 = dma.done %s236, 512
        $region40: #{tpu_custom_call.1} parent=35 // pred_fallthru
          _
        %s244 = sand.u32 %s24, 1
        %s245 = scalar_lea.sflag [#allocation6], %s244
        %s246 = sand.u32 %s58, 1
        %s247 = smul.addr %s246, 32
        %s248 = scalar_lea.vmem [#allocation5], %s247
        // Predicated region
        $region41: #{tpu_custom_call.1} parent=35 // pred_check
          %p249 = pneg %p71
        $region42: #{tpu_custom_call.1} parent=35 // pred_check_branch
          %251 = sbr.rel (%p249) target = $region44
        $region43: #{tpu_custom_call.1} parent=35 // pred_region
          %252 = dma.done %s245, 512
        $region44: #{tpu_custom_call.1} parent=35 // pred_fallthru
          _
        // Predicated region
        $region45: #{tpu_custom_call.1} parent=35 // pred_check
          %p253 = pneg %p92
        $region46: #{tpu_custom_call.1} parent=35 // pred_check_branch
          %255 = sbr.rel (%p253) target = $region48
        $region47: #{tpu_custom_call.1} parent=35 // pred_region
          %256 = dma.done [#allocation6], 512
        $region48: #{tpu_custom_call.1} parent=35 // pred_fallthru
          _
        %s257 = sand.u32 %s32, 1
        %s258 = scalar_lea.sflag [#allocation3], %s257
        %s259 = sand.u32 %s32, 1
        %s260 = smul.addr %s259, 32
        %s261 = scalar_lea.vmem [#allocation2], %s260
        %p262 = pneg %p45
        %p263 = pneg %p42
        %s264 = sand.u32 %s24, 1
        %s265 = scalar_lea.sflag [#allocation6], %s264
        %s266 = sand.u32 %s58, 1
        %s267 = smul.addr %s266, 32
        %s268 = scalar_lea.vmem [#allocation5], %s267
        %p269 = pneg %p71
        %p270 = pneg %p68
        %p271 = pneg %p92
        %p272 = pneg %p89
        %p273 = pneg %p113
        %p274 = pneg %p110
        %p275 = pneg %p139
        %p276 = pneg %p136
        %s277 = sand.u32 %s126, 1
        %s278 = scalar_lea.sflag [#allocation4], %s277
        %s279 = sand.u32 %s126, 1
        %s280 = smul.addr %s279, 16
        %s281 = scalar_lea.vmem [#allocation8], %s280
        %s282 = smul.u32 4, %s24
        %s283 = ssub.s32 5, %s282
        %p284 = scmp.lt.s32.totalorder %s283, 4
        %s285 = scalar_select %p284, %s283, 4
        %s286 = smul.u32 128, %s285
        %s287 = smul.u32 4, %s24
        %s288 = ssub.s32 5, %s287
        %p289 = scmp.lt.s32.totalorder %s288, 4
        %s290 = scalar_select %p289, %s288, 4
        %s291 = smul.u32 128, %s290
        %s292 = smul.u32 4, %s24
        %s293 = ssub.s32 5, %s292
        %p294 = scmp.lt.s32.totalorder %s293, 4
        %s295 = scalar_select %p294, %s293, 4
        %s296 = smul.u32 64, %s295
        %v298 = vld [vmem:[%s239] sm:$0xff]
        %v299 = vld [vmem:[%s239 + $0x8] sm:$0xff]
        %v300 = vld [vmem:[%s239 + $0x10] sm:$0xff]
        %v301 = vld [vmem:[%s239 + $0x18] sm:$0xff]
        %v302 = vld [vmem:[%s248] sm:$0xff]
        %v303 = vld [vmem:[%s248 + $0x8] sm:$0xff]
        %v304 = vld [vmem:[%s248 + $0x10] sm:$0xff]
        %v305 = vld [vmem:[%s248 + $0x18] sm:$0xff]
        %v306 = vadd.f32 %v298, %v302
        %v307 = vadd.f32 %v299, %v303
        %v308 = vadd.f32 %v300, %v304
        %v309 = vadd.f32 %v301, %v305
        %v310 = vpack.c.bf16 %v307, %v306
        %v311 = vpack.c.bf16 %v309, %v308
        %v312 = vld [vmem:[#allocation7] sm:$0xf]
        %v313 = vld [vmem:[#allocation7 + $0x4] sm:$0xf]
        %v314 = vld [vmem:[#allocation7 + $0x8] sm:$0xf]
        %v315 = vld [vmem:[#allocation7 + $0xc] sm:$0xf]
        %v316 = vld [vmem:[#allocation7 + $0x10] sm:$0xf]
        %v317 = vld [vmem:[#allocation7 + $0x14] sm:$0xf]
        %v318 = vld [vmem:[#allocation7 + $0x18] sm:$0xf]
        %v319 = vld [vmem:[#allocation7 + $0x1c] sm:$0xf]
        %v320 = vld [vmem:[%s3] sm:$0x1]
        %v322 = vlaneseq
        %v323 = vshrl.u32 %v322, 7
        %v324 = vsub.s32 0, %v323
        %v325 = vrot.slane %v320, %v324
        %v335 = vunpack.c.l.b16 %v312
        %v336 = vunpack.c.l.b16 %v313
        %v337 = vunpack.c.l.b16 %v314
        %v338 = vunpack.c.l.b16 %v315
        %v339 = vunpack.c.l.b16 %v316
        %v340 = vunpack.c.l.b16 %v317
        %v341 = vunpack.c.l.b16 %v318
        %v342 = vunpack.c.l.b16 %v319
        %v343 = vpack.c.b16 %v336, %v335
        %v344 = vpack.c.b16 %v338, %v337
        %v345 = vpack.c.b16 %v340, %v339
        %v346 = vpack.c.b16 %v342, %v341
        %vm351 = vcmask 523264
        %v353 = vsel %vm351, %v310, 0
        %v356 = vsel %vm351, %v311, 0
        %358 = vmatprep.subr.bf16.mxu0 0
        %359 = vmatpush1.bf16.msra.mxu0 0
        %360 = vmatprep.subr.bf16.mxu0 0
        %361 = vmatpush1.bf16.msra.mxu0 0
        %362 = vmatprep.subr.bf16.mxu0 0
        %363 = vmatpush1.bf16.msra.mxu0 0
        %364 = vmatprep.subr.bf16.mxu0 0
        %365 = vmatpush1.bf16.msra.mxu0 0
        %366 = vmatprep.subr.bf16.mxu0 0
        %367 = vmatpush1.bf16.msra.mxu0 %v346
        %368 = vmatprep.subr.bf16.mxu0 0
        %369 = vmatpush1.bf16.msra.mxu0 %v345
        %370 = vmatprep.subr.bf16.mxu0 0
        %371 = vmatpush1.bf16.msra.mxu0 %v344
        %372 = vmatprep.subr.bf16.mxu0 0
        %373 = vmatpush1.bf16.msra.mxu0 %v343
        %374 = vmatprep.subr.bf16.mxu0 0
        %375 = vmatpush2.bf16.msra.mxu0 0
        %376 = vmatprep.subr.bf16.mxu0 0
        %377 = vmatpush2.bf16.msra.mxu0 0
        %378 = vmatprep.subr.bf16.mxu0 0
        %379 = vmatpush2.bf16.msra.mxu0 0
        %380 = vmatprep.subr.bf16.mxu0 0
        %381 = vmatpush2.bf16.msra.mxu0 0
        %382 = vmatprep.subr.bf16.mxu0 0
        %383 = vmatpush2.bf16.msra.mxu0 0
        %384 = vmatprep.subr.bf16.mxu0 0
        %385 = vmatpush2.bf16.msra.mxu0 0
        %386 = vmatprep.subr.bf16.mxu0 0
        %387 = vmatpush2.bf16.msra.mxu0 0
        %388 = vmatprep.subr.bf16.mxu0 0
        %389 = vmatpush2.bf16.msra.mxu0 0
        %390 = vmatprep.mubr.bf16.mxu0 0
        %391 = vmatmul.mubr.bf16.gmra.mxu0 %v353
        %v392 = vpop.f32.mrf.mxu0
        %v393 = vadd.f32 %v325, %v392
        %v394 = vpop.f32.mrf.mxu0
        %v395 = vpop.f32.mrf.mxu0
        %v396 = vadd.f32 %v325, %v395
        %v397 = vpop.f32.mrf.mxu0
        %398 = vmatprep.mubr.bf16.mxu0 0
        %399 = vmatmul.mubr.bf16.gmra.mxu0 %v356
        %v400 = vpop.f32.mrf.mxu0
        %v401 = vadd.f32 %v325, %v400
        %v402 = vpop.f32.mrf.mxu0
        %v403 = vpop.f32.mrf.mxu0
        %v404 = vadd.f32 %v325, %v403
        %v405 = vpop.f32.mrf.mxu0
        %406 = vdwg.mxu0
        %v407 = vpack.c.bf16 %v396, %v393
        %v408 = vpack.c.bf16 %v404, %v401
        %v411 = vunpack.c.l.b16 %v407
        %v412 = vunpack.c.h.b16 %v407
        %v413 = vunpack.c.l.b16 %v408
        %v414 = vunpack.c.h.b16 %v408
        %v415 = vpack.c.b16 %v411, %v411
        %v416 = vpack.c.b16 %v412, %v412
        %v417 = vpack.c.b16 %v413, %v413
        %v418 = vpack.c.b16 %v414, %v414
        %vm423 = vcmask 519168
        %424 = vst.msk [vmem:[%s281] sm:$0xf] %vm423, %v415
        %425 = vst.msk [vmem:[%s281 + $0x4] sm:$0xf] %vm423, %v416
        %426 = vst.msk [vmem:[%s281 + $0x8] sm:$0xf] %vm423, %v417
        %427 = vst.msk [vmem:[%s281 + $0xc] sm:$0xf] %vm423, %v418
        %s428 = sand.u32 %s126, 1
        %s429 = scalar_lea.sflag [#allocation4], %s428
        %s430 = sand.u32 %s126, 1
        %s431 = smul.addr %s430, 16
        %s432 = scalar_lea.vmem [#allocation8], %s431
        // Predicated region
        $region49: #{tpu_custom_call.1} parent=35 // pred_check
          %p433 = pneg %p136
        $region50: #{tpu_custom_call.1} parent=35 // pred_check_branch
          %435 = sbr.rel (%p433) target = $region52
        $region51: #{tpu_custom_call.1} parent=35 // pred_region
          %s436 = smul.u32 4, %s24
          %s437 = ssub.s32 5, %s436
          %p438 = scmp.lt.s32.totalorder %s437, 4
          %s439 = scalar_select %p438, %s437, 4
          %s440 = smul.u32 64, %s439
          %s442 = ssub.s32 256, %s440
          %443 = vsyncadd %s429, %s442
          %p444 = scmp.ne.s32.totalorder 0, %s440
          %s445 = smul.addr %s436, 64
          %s446 = scalar_lea.hbm %s4, %s445
          %s447 = smul.u32 4, %s439
          %s448 = sshll.u32 %s432, 4
          %s449 = int_to_ptr.vmem [resolvable:$true] %s448
          %s450 = sshll.u32 %s447, 4
          %454 = dma.vmem_to_hbm [thread:$0]  (%p444), %s449, %s450, %s446, %s429, 64, 64, 4
        $region52: #{tpu_custom_call.1} parent=35 // pred_fallthru
          _
      $region36: #{tpu_custom_call.1} parent=5 // pred_fallthru
        _
      %p455 = scmp.le.s32.totalorder 2, %s19
      // Predicated region
      $region53: #{tpu_custom_call.1} parent=5 // pred_check
        %p456 = pneg %p455
      $region54: #{tpu_custom_call.1} parent=5 // pred_check_branch
        %458 = sbr.rel (%p456) target = $region56
      $region55: #{tpu_custom_call.1} parent=5 // pred_region
        %s459 = ssub.s32 %s19, 2
        // Predicated region
        $region57: #{tpu_custom_call.1} parent=55 // pred_check
          %p460 = pneg %p142
        $region58: #{tpu_custom_call.1} parent=55 // pred_check_branch
          %462 = sbr.rel (%p460) target = $region60
        $region59: #{tpu_custom_call.1} parent=55 // pred_region
          %s463 = sand.u32 %s127, 1
          %s464 = scalar_lea.sflag [#allocation4], %s463
          %s465 = sand.u32 %s127, 1
          %s466 = smul.addr %s465, 16
          %s467 = scalar_lea.vmem [#allocation8], %s466
          %468 = dma.done %s464, 256
        $region60: #{tpu_custom_call.1} parent=55 // pred_fallthru
          _
      $region56: #{tpu_custom_call.1} parent=5 // pred_fallthru
        _
    $region6: #{tpu_custom_call.1} parent=1 // loop_footer
      %s23 = sadd.s32 1, %s19
    $region7: #{tpu_custom_call.1} parent=1 // loop_footer_branch
      %18 = sbr.rel target = $region3
    $region8: #{tpu_custom_call.1} parent=1 // loop_exit
      _
    %469 = vsyncpa [#allocation3], 1
    %s470 = scalar_lea.sflag [#allocation3], 1
    %471 = vsyncpa %s470, 1
    %472 = vsyncpa [#allocation6], 1
    %s473 = scalar_lea.sflag [#allocation6], 1
    %474 = vsyncpa %s473, 1
    %475 = vsyncpa [#allocation4], 1
    %s476 = scalar_lea.sflag [#allocation4], 1
    %477 = vsyncpa %s476, 1

</llo_original>
